<compile_context>
chip_gen: v6e
topology: v6e:2x2x1
jax: 0.10.0
libtpu: 0.0.40
codegen_flags: <defaults>
</compile_context>

<pallas_src>
import jax
import jax.numpy as jnp
from jax import lax
from jax.experimental import pallas as pl
from jax.experimental.pallas import tpu as pltpu

EPS = 1e-3
CHK = 128  # lane-chunk width for the streaming body (one vreg column group)


def bn_relu_kernel(x_ref, gb_ref, o_ref):
    # x_ref: (Cb, M).  gb_ref: (Cb, 2) = [gamma | beta].  o_ref: (Cb, M).
    Cb, M = x_ref.shape
    n_full = M // CHK
    rem = M % CHK
    inv_m = 1.0 / float(M)  # static

    # ---- Pass 1: single chunked sweep, sum and sum-of-squares together. ----
    def stats_body(j, carry):
        s, ss = carry
        off = pl.multiple_of(j * CHK, CHK)
        xc = x_ref[:, pl.ds(off, CHK)].astype(jnp.float32)
        s = s + jnp.sum(xc, axis=1, keepdims=True)
        ss = ss + jnp.sum(xc * xc, axis=1, keepdims=True)
        return s, ss

    zero = jnp.zeros((Cb, 1), jnp.float32)
    s, ss = lax.fori_loop(0, n_full, stats_body, (zero, zero), unroll=True)

    if rem:  # static ragged tail, handled once
        off = pl.multiple_of(n_full * CHK, CHK)
        xr = x_ref[:, pl.ds(off, rem)].astype(jnp.float32)
        s = s + jnp.sum(xr, axis=1, keepdims=True)
        ss = ss + jnp.sum(xr * xr, axis=1, keepdims=True)

    mean = s * inv_m
    var = ss * inv_m - mean * mean                 # biased batch variance
    inv_std = lax.rsqrt(var + EPS)

    gamma = gb_ref[:, 0:1]
    beta = gb_ref[:, 1:2]
    scale = inv_std * gamma                        # (Cb, 1)
    shift = beta - mean * scale                    # (Cb, 1)

    # Hoist broadcasts out of the normalize loop.
    scale_b = jnp.broadcast_to(scale, (Cb, CHK))
    shift_b = jnp.broadcast_to(shift, (Cb, CHK))

    # ---- Pass 2: chunked normalize + ReLU + store (re-reads VMEM tile). ----
    def norm_body(j, carry):
        off = pl.multiple_of(j * CHK, CHK)
        xc = x_ref[:, pl.ds(off, CHK)].astype(jnp.float32)
        y = jnp.maximum(xc * scale_b + shift_b, 0.0)
        o_ref[:, pl.ds(off, CHK)] = y.astype(o_ref.dtype)
        return carry

    lax.fori_loop(0, n_full, norm_body, 0, unroll=True)

    if rem:
        off = pl.multiple_of(n_full * CHK, CHK)
        xr = x_ref[:, pl.ds(off, rem)].astype(jnp.float32)
        y = jnp.maximum(xr * scale + shift, 0.0)   # (Cb,1) broadcast, runs once
        o_ref[:, pl.ds(off, rem)] = y.astype(o_ref.dtype)


def _pick_c_block(C):
    """v7x has 2 TensorCores/chip -> split channels 2-way; v5e/v6e -> 1 block."""
    n_tc = 1
    try:
        kind = jax.devices()[0].device_kind.lower()
        if "v7" in kind:
            n_tc = 2
    except Exception:
        pass
    if n_tc >= 2 and C % 16 == 0:
        return C // 2          # multiple of 8, one block per TensorCore
    return C                   # single grid step on single-TC chips


def batchnorm_relu(x_nchw, gamma, beta):
    """x_nchw: (N, C, H, W) float32. gamma/beta: (C,) float32."""
    N, C, H, W = x_nchw.shape
    M = N * H * W

    if N == 1:
        x2d = x_nchw.reshape(C, M)            # metadata-only view
    else:
        # TODO(synk): replace with in-kernel N-axis accumulation (see header).
        x2d = jnp.transpose(x_nchw, (1, 0, 2, 3)).reshape(C, M)

    # Fold gamma and beta into a single (C, 2) input -> one DMA instead of two.
    gb = jnp.stack([gamma.astype(jnp.float32), beta.astype(jnp.float32)], axis=1)

    c_block = _pick_c_block(C)
    grid = (C // c_block,)

    out2d = pl.pallas_call(
        bn_relu_kernel,
        out_shape=jax.ShapeDtypeStruct((C, M), x_nchw.dtype),
        grid_spec=pltpu.PrefetchScalarGridSpec(
            num_scalar_prefetch=0,
            grid=grid,
            in_specs=[
                pl.BlockSpec((c_block, M), lambda i: (i, 0)),
                pl.BlockSpec((c_block, 2), lambda i: (i, 0)),
            ],
            out_specs=pl.BlockSpec((c_block, M), lambda i: (i, 0)),
        ),
        compiler_params=pltpu.CompilerParams(
            dimension_semantics=("parallel",)
        ),
    )(x2d, gb)

    if N == 1:
        return out2d.reshape(N, C, H, W)
    return out2d.reshape(C, N, H, W).transpose(1, 0, 2, 3)


if __name__ == "__main__":
    key = jax.random.PRNGKey(0)
    kx, kg, kb = jax.random.split(key, 3)

    # Shape implied by the module: x61 = randn([1, 64, 28, 28]); C fixed at 64.
    N, C, H, W = 1, 64, 28, 28
    x = jax.random.normal(kx, (N, C, H, W), dtype=jnp.float32)

    # Affine params (PyTorch default init is gamma=1, beta=0; use random values
    # to exercise the affine path -- same forward semantics).
    gamma = 1.0 + 0.1 * jax.random.normal(kg, (C,), dtype=jnp.float32)
    beta = 0.1 * jax.random.normal(kb, (C,), dtype=jnp.float32)

    out = batchnorm_relu(x, gamma, beta)
    jax.block_until_ready(out)

    # Pure-JAX reference of the same math (training-mode BN + ReLU).
    mean = jnp.mean(x, axis=(0, 2, 3), keepdims=True)
    var = jnp.mean((x - mean) ** 2, axis=(0, 2, 3), keepdims=True)
    ref = jnp.maximum(
        (x - mean) * lax.rsqrt(var + EPS) * gamma.reshape(1, C, 1, 1)
        + beta.reshape(1, C, 1, 1),
        0.0,
    )
    assert out.shape == (N, C, H, W)
    assert jnp.allclose(out, ref, atol=5e-5, rtol=1e-5)

    print("KERNEL_OK")
</pallas_src>

<mosaic_0001>
module attributes {stable_mosaic.version = 11 : i64} {
  func.func @bn_relu_kernel(%arg0: i32, %arg1: memref<64x784xf32, #tpu.memory_space<vmem>>, %arg2: memref<64x2xf32, #tpu.memory_space<vmem>>, %arg3: memref<64x784xf32, #tpu.memory_space<vmem>>) attributes {dimension_semantics = [#tpu.dimension_semantics<parallel>], iteration_bounds = array<i64: 1>, scalar_prefetch = 0 : i64, scratch_operands = 0 : i64, tpu.core_type = #tpu.core_type<tc>, window_params = [{transform_indices = @transform_0, window_bounds = array<i64: 64, 784>}, {transform_indices = @transform_1, window_bounds = array<i64: 64, 2>}, {transform_indices = @transform_2, window_bounds = array<i64: 64, 784>}]} {
    %cst = arith.constant 0.000000e+00 : f32
    %0 = vector.broadcast %cst : f32 to vector<64x1xf32>
    %c0_i32 = arith.constant 0 : i32
    %c128_i32 = arith.constant 128 : i32
    %1 = arith.muli %c0_i32, %c128_i32 : i32
    %2 = tpu.assume_multiple %1, 128 : i32
    %c0 = arith.constant 0 : index
    %3 = arith.index_cast %2 : i32 to index
    %4 = vector.load %arg1[%c0, %3] : memref<64x784xf32, #tpu.memory_space<vmem>>, vector<64x128xf32>
    %cst_0 = arith.constant dense<0.000000e+00> : vector<64xf32>
    %5 = vector.multi_reduction <add>, %4, %cst_0 [1] : vector<64x128xf32> to vector<64xf32>
    %6 = vector.shape_cast %5 : vector<64xf32> to vector<64x1xf32>
    %7 = arith.addf %0, %6 : vector<64x1xf32>
    %8 = arith.mulf %4, %4 : vector<64x128xf32>
    %cst_1 = arith.constant dense<0.000000e+00> : vector<64xf32>
    %9 = vector.multi_reduction <add>, %8, %cst_1 [1] : vector<64x128xf32> to vector<64xf32>
    %10 = vector.shape_cast %9 : vector<64xf32> to vector<64x1xf32>
    %11 = arith.addf %0, %10 : vector<64x1xf32>
    %c1_i32 = arith.constant 1 : i32
    %c128_i32_2 = arith.constant 128 : i32
    %12 = arith.muli %c1_i32, %c128_i32_2 : i32
    %13 = tpu.assume_multiple %12, 128 : i32
    %c0_3 = arith.constant 0 : index
    %14 = arith.index_cast %13 : i32 to index
    %15 = vector.load %arg1[%c0_3, %14] : memref<64x784xf32, #tpu.memory_space<vmem>>, vector<64x128xf32>
    %cst_4 = arith.constant dense<0.000000e+00> : vector<64xf32>
    %16 = vector.multi_reduction <add>, %15, %cst_4 [1] : vector<64x128xf32> to vector<64xf32>
    %17 = vector.shape_cast %16 : vector<64xf32> to vector<64x1xf32>
    %18 = arith.addf %7, %17 : vector<64x1xf32>
    %19 = arith.mulf %15, %15 : vector<64x128xf32>
    %cst_5 = arith.constant dense<0.000000e+00> : vector<64xf32>
    %20 = vector.multi_reduction <add>, %19, %cst_5 [1] : vector<64x128xf32> to vector<64xf32>
    %21 = vector.shape_cast %20 : vector<64xf32> to vector<64x1xf32>
    %22 = arith.addf %11, %21 : vector<64x1xf32>
    %c2_i32 = arith.constant 2 : i32
    %c128_i32_6 = arith.constant 128 : i32
    %23 = arith.muli %c2_i32, %c128_i32_6 : i32
    %24 = tpu.assume_multiple %23, 128 : i32
    %c0_7 = arith.constant 0 : index
    %25 = arith.index_cast %24 : i32 to index
    %26 = vector.load %arg1[%c0_7, %25] : memref<64x784xf32, #tpu.memory_space<vmem>>, vector<64x128xf32>
    %cst_8 = arith.constant dense<0.000000e+00> : vector<64xf32>
    %27 = vector.multi_reduction <add>, %26, %cst_8 [1] : vector<64x128xf32> to vector<64xf32>
    %28 = vector.shape_cast %27 : vector<64xf32> to vector<64x1xf32>
    %29 = arith.addf %18, %28 : vector<64x1xf32>
    %30 = arith.mulf %26, %26 : vector<64x128xf32>
    %cst_9 = arith.constant dense<0.000000e+00> : vector<64xf32>
    %31 = vector.multi_reduction <add>, %30, %cst_9 [1] : vector<64x128xf32> to vector<64xf32>
    %32 = vector.shape_cast %31 : vector<64xf32> to vector<64x1xf32>
    %33 = arith.addf %22, %32 : vector<64x1xf32>
    %c3_i32 = arith.constant 3 : i32
    %c128_i32_10 = arith.constant 128 : i32
    %34 = arith.muli %c3_i32, %c128_i32_10 : i32
    %35 = tpu.assume_multiple %34, 128 : i32
    %c0_11 = arith.constant 0 : index
    %36 = arith.index_cast %35 : i32 to index
    %37 = vector.load %arg1[%c0_11, %36] : memref<64x784xf32, #tpu.memory_space<vmem>>, vector<64x128xf32>
    %cst_12 = arith.constant dense<0.000000e+00> : vector<64xf32>
    %38 = vector.multi_reduction <add>, %37, %cst_12 [1] : vector<64x128xf32> to vector<64xf32>
    %39 = vector.shape_cast %38 : vector<64xf32> to vector<64x1xf32>
    %40 = arith.addf %29, %39 : vector<64x1xf32>
    %41 = arith.mulf %37, %37 : vector<64x128xf32>
    %cst_13 = arith.constant dense<0.000000e+00> : vector<64xf32>
    %42 = vector.multi_reduction <add>, %41, %cst_13 [1] : vector<64x128xf32> to vector<64xf32>
    %43 = vector.shape_cast %42 : vector<64xf32> to vector<64x1xf32>
    %44 = arith.addf %33, %43 : vector<64x1xf32>
    %c4_i32 = arith.constant 4 : i32
    %c128_i32_14 = arith.constant 128 : i32
    %45 = arith.muli %c4_i32, %c128_i32_14 : i32
    %46 = tpu.assume_multiple %45, 128 : i32
    %c0_15 = arith.constant 0 : index
    %47 = arith.index_cast %46 : i32 to index
    %48 = vector.load %arg1[%c0_15, %47] : memref<64x784xf32, #tpu.memory_space<vmem>>, vector<64x128xf32>
    %cst_16 = arith.constant dense<0.000000e+00> : vector<64xf32>
    %49 = vector.multi_reduction <add>, %48, %cst_16 [1] : vector<64x128xf32> to vector<64xf32>
    %50 = vector.shape_cast %49 : vector<64xf32> to vector<64x1xf32>
    %51 = arith.addf %40, %50 : vector<64x1xf32>
    %52 = arith.mulf %48, %48 : vector<64x128xf32>
    %cst_17 = arith.constant dense<0.000000e+00> : vector<64xf32>
    %53 = vector.multi_reduction <add>, %52, %cst_17 [1] : vector<64x128xf32> to vector<64xf32>
    %54 = vector.shape_cast %53 : vector<64xf32> to vector<64x1xf32>
    %55 = arith.addf %44, %54 : vector<64x1xf32>
    %c5_i32 = arith.constant 5 : i32
    %c128_i32_18 = arith.constant 128 : i32
    %56 = arith.muli %c5_i32, %c128_i32_18 : i32
    %57 = tpu.assume_multiple %56, 128 : i32
    %c0_19 = arith.constant 0 : index
    %58 = arith.index_cast %57 : i32 to index
    %59 = vector.load %arg1[%c0_19, %58] : memref<64x784xf32, #tpu.memory_space<vmem>>, vector<64x128xf32>
    %cst_20 = arith.constant dense<0.000000e+00> : vector<64xf32>
    %60 = vector.multi_reduction <add>, %59, %cst_20 [1] : vector<64x128xf32> to vector<64xf32>
    %61 = vector.shape_cast %60 : vector<64xf32> to vector<64x1xf32>
    %62 = arith.addf %51, %61 : vector<64x1xf32>
    %63 = arith.mulf %59, %59 : vector<64x128xf32>
    %cst_21 = arith.constant dense<0.000000e+00> : vector<64xf32>
    %64 = vector.multi_reduction <add>, %63, %cst_21 [1] : vector<64x128xf32> to vector<64xf32>
    %65 = vector.shape_cast %64 : vector<64xf32> to vector<64x1xf32>
    %66 = arith.addf %55, %65 : vector<64x1xf32>
    %c6_i32 = arith.constant 6 : i32
    %c768_i32 = arith.constant 768 : i32
    %67 = tpu.assume_multiple %c768_i32, 128 : i32
    %c0_22 = arith.constant 0 : index
    %68 = arith.index_cast %67 : i32 to index
    %69 = vector.load %arg1[%c0_22, %68] : memref<64x784xf32, #tpu.memory_space<vmem>>, vector<64x16xf32>
    %cst_23 = arith.constant dense<0.000000e+00> : vector<64xf32>
    %70 = vector.multi_reduction <add>, %69, %cst_23 [1] : vector<64x16xf32> to vector<64xf32>
    %71 = vector.shape_cast %70 : vector<64xf32> to vector<64x1xf32>
    %72 = arith.addf %62, %71 : vector<64x1xf32>
    %73 = arith.mulf %69, %69 : vector<64x16xf32>
    %cst_24 = arith.constant dense<0.000000e+00> : vector<64xf32>
    %74 = vector.multi_reduction <add>, %73, %cst_24 [1] : vector<64x16xf32> to vector<64xf32>
    %75 = vector.shape_cast %74 : vector<64xf32> to vector<64x1xf32>
    %76 = arith.addf %66, %75 : vector<64x1xf32>
    %cst_25 = arith.constant 0.00127551018 : f32
    %77 = vector.broadcast %cst_25 : f32 to vector<64x1xf32>
    %78 = arith.mulf %72, %77 : vector<64x1xf32>
    %cst_26 = arith.constant 0.00127551018 : f32
    %79 = vector.broadcast %cst_26 : f32 to vector<64x1xf32>
    %80 = arith.mulf %76, %79 : vector<64x1xf32>
    %81 = arith.mulf %78, %78 : vector<64x1xf32>
    %82 = arith.subf %80, %81 : vector<64x1xf32>
    %cst_27 = arith.constant 1.000000e-03 : f32
    %83 = vector.broadcast %cst_27 : f32 to vector<64x1xf32>
    %84 = arith.addf %82, %83 : vector<64x1xf32>
    %85 = math.rsqrt %84 : vector<64x1xf32>
    %c0_28 = arith.constant 0 : index
    %c0_29 = arith.constant 0 : index
    %86 = vector.load %arg2[%c0_28, %c0_29] : memref<64x2xf32, #tpu.memory_space<vmem>>, vector<64x1xf32>
    %c0_30 = arith.constant 0 : index
    %c1 = arith.constant 1 : index
    %87 = vector.load %arg2[%c0_30, %c1] : memref<64x2xf32, #tpu.memory_space<vmem>>, vector<64x1xf32>
    %88 = arith.mulf %85, %86 : vector<64x1xf32>
    %89 = arith.mulf %78, %88 : vector<64x1xf32>
    %90 = arith.subf %87, %89 : vector<64x1xf32>
    %91 = vector.shape_cast %88 : vector<64x1xf32> to vector<64x1xf32>
    %92 = vector.broadcast %91 : vector<64x1xf32> to vector<64x128xf32>
    %93 = vector.shape_cast %90 : vector<64x1xf32> to vector<64x1xf32>
    %94 = vector.broadcast %93 : vector<64x1xf32> to vector<64x128xf32>
    %c0_i32_31 = arith.constant 0 : i32
    %c128_i32_32 = arith.constant 128 : i32
    %95 = arith.muli %c0_i32_31, %c128_i32_32 : i32
    %96 = tpu.assume_multiple %95, 128 : i32
    %c0_33 = arith.constant 0 : index
    %97 = arith.index_cast %96 : i32 to index
    %98 = vector.load %arg1[%c0_33, %97] : memref<64x784xf32, #tpu.memory_space<vmem>>, vector<64x128xf32>
    %99 = arith.mulf %98, %92 : vector<64x128xf32>
    %100 = arith.addf %99, %94 : vector<64x128xf32>
    %cst_34 = arith.constant 0.000000e+00 : f32
    %101 = vector.broadcast %cst_34 : f32 to vector<64x128xf32>
    %102 = arith.maximumf %100, %101 : vector<64x128xf32>
    %c0_35 = arith.constant 0 : index
    %103 = arith.index_cast %96 : i32 to index
    %104 = vector.load %arg3[%c0_35, %103] : memref<64x784xf32, #tpu.memory_space<vmem>>, vector<64x128xf32>
    tpu.vector_store %arg3[%c0_35, %103], %102 {strides = array<i32>} : memref<64x784xf32, #tpu.memory_space<vmem>>, vector<64x128xf32>,
    %c1_i32_36 = arith.constant 1 : i32
    %c128_i32_37 = arith.constant 128 : i32
    %105 = arith.muli %c1_i32_36, %c128_i32_37 : i32
    %106 = tpu.assume_multiple %105, 128 : i32
    %c0_38 = arith.constant 0 : index
    %107 = arith.index_cast %106 : i32 to index
    %108 = vector.load %arg1[%c0_38, %107] : memref<64x784xf32, #tpu.memory_space<vmem>>, vector<64x128xf32>
    %109 = arith.mulf %108, %92 : vector<64x128xf32>
    %110 = arith.addf %109, %94 : vector<64x128xf32>
    %cst_39 = arith.constant 0.000000e+00 : f32
    %111 = vector.broadcast %cst_39 : f32 to vector<64x128xf32>
    %112 = arith.maximumf %110, %111 : vector<64x128xf32>
    %c0_40 = arith.constant 0 : index
    %113 = arith.index_cast %106 : i32 to index
    %114 = vector.load %arg3[%c0_40, %113] : memref<64x784xf32, #tpu.memory_space<vmem>>, vector<64x128xf32>
    tpu.vector_store %arg3[%c0_40, %113], %112 {strides = array<i32>} : memref<64x784xf32, #tpu.memory_space<vmem>>, vector<64x128xf32>,
    %c2_i32_41 = arith.constant 2 : i32
    %c128_i32_42 = arith.constant 128 : i32
    %115 = arith.muli %c2_i32_41, %c128_i32_42 : i32
    %116 = tpu.assume_multiple %115, 128 : i32
    %c0_43 = arith.constant 0 : index
    %117 = arith.index_cast %116 : i32 to index
    %118 = vector.load %arg1[%c0_43, %117] : memref<64x784xf32, #tpu.memory_space<vmem>>, vector<64x128xf32>
    %119 = arith.mulf %118, %92 : vector<64x128xf32>
    %120 = arith.addf %119, %94 : vector<64x128xf32>
    %cst_44 = arith.constant 0.000000e+00 : f32
    %121 = vector.broadcast %cst_44 : f32 to vector<64x128xf32>
    %122 = arith.maximumf %120, %121 : vector<64x128xf32>
    %c0_45 = arith.constant 0 : index
    %123 = arith.index_cast %116 : i32 to index
    %124 = vector.load %arg3[%c0_45, %123] : memref<64x784xf32, #tpu.memory_space<vmem>>, vector<64x128xf32>
    tpu.vector_store %arg3[%c0_45, %123], %122 {strides = array<i32>} : memref<64x784xf32, #tpu.memory_space<vmem>>, vector<64x128xf32>,
    %c3_i32_46 = arith.constant 3 : i32
    %c128_i32_47 = arith.constant 128 : i32
    %125 = arith.muli %c3_i32_46, %c128_i32_47 : i32
    %126 = tpu.assume_multiple %125, 128 : i32
    %c0_48 = arith.constant 0 : index
    %127 = arith.index_cast %126 : i32 to index
    %128 = vector.load %arg1[%c0_48, %127] : memref<64x784xf32, #tpu.memory_space<vmem>>, vector<64x128xf32>
    %129 = arith.mulf %128, %92 : vector<64x128xf32>
    %130 = arith.addf %129, %94 : vector<64x128xf32>
    %cst_49 = arith.constant 0.000000e+00 : f32
    %131 = vector.broadcast %cst_49 : f32 to vector<64x128xf32>
    %132 = arith.maximumf %130, %131 : vector<64x128xf32>
    %c0_50 = arith.constant 0 : index
    %133 = arith.index_cast %126 : i32 to index
    %134 = vector.load %arg3[%c0_50, %133] : memref<64x784xf32, #tpu.memory_space<vmem>>, vector<64x128xf32>
    tpu.vector_store %arg3[%c0_50, %133], %132 {strides = array<i32>} : memref<64x784xf32, #tpu.memory_space<vmem>>, vector<64x128xf32>,
    %c4_i32_51 = arith.constant 4 : i32
    %c128_i32_52 = arith.constant 128 : i32
    %135 = arith.muli %c4_i32_51, %c128_i32_52 : i32
    %136 = tpu.assume_multiple %135, 128 : i32
    %c0_53 = arith.constant 0 : index
    %137 = arith.index_cast %136 : i32 to index
    %138 = vector.load %arg1[%c0_53, %137] : memref<64x784xf32, #tpu.memory_space<vmem>>, vector<64x128xf32>
    %139 = arith.mulf %138, %92 : vector<64x128xf32>
    %140 = arith.addf %139, %94 : vector<64x128xf32>
    %cst_54 = arith.constant 0.000000e+00 : f32
    %141 = vector.broadcast %cst_54 : f32 to vector<64x128xf32>
    %142 = arith.maximumf %140, %141 : vector<64x128xf32>
    %c0_55 = arith.constant 0 : index
    %143 = arith.index_cast %136 : i32 to index
    %144 = vector.load %arg3[%c0_55, %143] : memref<64x784xf32, #tpu.memory_space<vmem>>, vector<64x128xf32>
    tpu.vector_store %arg3[%c0_55, %143], %142 {strides = array<i32>} : memref<64x784xf32, #tpu.memory_space<vmem>>, vector<64x128xf32>,
    %c5_i32_56 = arith.constant 5 : i32
    %c128_i32_57 = arith.constant 128 : i32
    %145 = arith.muli %c5_i32_56, %c128_i32_57 : i32
    %146 = tpu.assume_multiple %145, 128 : i32
    %c0_58 = arith.constant 0 : index
    %147 = arith.index_cast %146 : i32 to index
    %148 = vector.load %arg1[%c0_58, %147] : memref<64x784xf32, #tpu.memory_space<vmem>>, vector<64x128xf32>
    %149 = arith.mulf %148, %92 : vector<64x128xf32>
    %150 = arith.addf %149, %94 : vector<64x128xf32>
    %cst_59 = arith.constant 0.000000e+00 : f32
    %151 = vector.broadcast %cst_59 : f32 to vector<64x128xf32>
    %152 = arith.maximumf %150, %151 : vector<64x128xf32>
    %c0_60 = arith.constant 0 : index
    %153 = arith.index_cast %146 : i32 to index
    %154 = vector.load %arg3[%c0_60, %153] : memref<64x784xf32, #tpu.memory_space<vmem>>, vector<64x128xf32>
    tpu.vector_store %arg3[%c0_60, %153], %152 {strides = array<i32>} : memref<64x784xf32, #tpu.memory_space<vmem>>, vector<64x128xf32>,
    %c6_i32_61 = arith.constant 6 : i32
    %c768_i32_62 = arith.constant 768 : i32
    %155 = tpu.assume_multiple %c768_i32_62, 128 : i32
    %c0_63 = arith.constant 0 : index
    %156 = arith.index_cast %155 : i32 to index
    %157 = vector.load %arg1[%c0_63, %156] : memref<64x784xf32, #tpu.memory_space<vmem>>, vector<64x16xf32>
    %158 = vector.broadcast %88 : vector<64x1xf32> to vector<64x16xf32>
    %159 = arith.mulf %157, %158 : vector<64x16xf32>
    %160 = vector.broadcast %90 : vector<64x1xf32> to vector<64x16xf32>
    %161 = arith.addf %159, %160 : vector<64x16xf32>
    %cst_64 = arith.constant 0.000000e+00 : f32
    %162 = vector.broadcast %cst_64 : f32 to vector<64x16xf32>
    %163 = arith.maximumf %161, %162 : vector<64x16xf32>
    %c0_65 = arith.constant 0 : index
    %164 = arith.index_cast %155 : i32 to index
    %165 = vector.load %arg3[%c0_65, %164] : memref<64x784xf32, #tpu.memory_space<vmem>>, vector<64x16xf32>
    tpu.vector_store %arg3[%c0_65, %164], %163 {strides = array<i32>} : memref<64x784xf32, #tpu.memory_space<vmem>>, vector<64x16xf32>,
    return
  }
  func.func @transform_0(%arg0: i32) -> (i32, i32) {
    %c0_i32 = arith.constant 0 : i32
    %c0_i32_0 = arith.constant 0 : i32
    return %arg0, %c0_i32 : i32, i32
  }
  func.func @transform_1(%arg0: i32) -> (i32, i32) {
    %c0_i32 = arith.constant 0 : i32
    %c0_i32_0 = arith.constant 0 : i32
    return %arg0, %c0_i32 : i32, i32
  }
  func.func @transform_2(%arg0: i32) -> (i32, i32) {
    %c0_i32 = arith.constant 0 : i32
    %c0_i32_0 = arith.constant 0 : i32
    return %arg0, %c0_i32 : i32, i32
  }
}

</mosaic_0001>

<llo_original>
// kernel: tpu_custom_call.1
$region0: #{tpu_custom_call.1}
  #allocation0 [shape = 'u32[]', space=smem, size = 0x4, offset = 0x4, fixed_abs, tag = 'smem constant byte address 0x4 - core index']
  #allocation1 [shape = 'u32[144,128]{1,0:T(1,128)}', space=vmem, size = 0x12000, scoped, tag = 'internal scratch']
  %s0 = inlined_call_operand.hbm [shape: f32[64,784], index: 0, kind: input, shape index: {}]
  %s1 = inlined_call_operand.vmem [shape: f32[64,2], index: 1, kind: input, shape index: {}]
  %s2 = inlined_call_operand.hbm [shape: f32[64,784], index: 2, kind: output, shape index: {}]
  %s3 = sld [smem:[#allocation0]]
  $region22: #{tpu_custom_call.1} parent=0
    _
  %s5 = ssub.s32 1, %s3
  %s6 = scalar_select 0, %s5, %s3
  $region1: #{tpu_custom_call.1} parent=0
    #allocation2 [shape = 'u8[229376]{0}', space=vmem, size = 0x38000, scoped, tag = 'input window, operand 0, single buffered']
    #allocation3 [shape = 's32[1]{0}', space=sflag, size = 0x4, scoped, tag = 'scoped memory for tpu_custom_call.1']
    #allocation4 [shape = 's32[1]{0}', space=sflag, size = 0x4, scoped, tag = 'scoped memory for tpu_custom_call.1']
    #allocation5 [shape = 'u8[229376]{0}', space=vmem, size = 0x38000, scoped, tag = 'output window, operand 0, single buffered']
    %7 = vsyncpa [#allocation3], 0
    %8 = vsyncpa [#allocation4], 0
    // Predicated region
    $region2: #{tpu_custom_call.1} parent=1 // pred_check
      _
    $region3: #{tpu_custom_call.1} parent=1 // pred_check_branch
      %10 = sbr.rel (0) target = $region5
    $region4: #{tpu_custom_call.1} parent=1 // pred_region
      %s12 = ssub.s32 7168, 7168
      %13 = vsyncadd [#allocation3], %s12
      %s14 = sshll.u32 [#allocation2], 4
      %s15 = int_to_ptr.vmem [resolvable:$true] %s14
      %20 = dma.hbm_to_vmem [thread:$0]  %s0, 7168, %s15, [#allocation3], 896, 896, 56
    $region5: #{tpu_custom_call.1} parent=1 // pred_fallthru
      _
    // Predicated region
    $region6: #{tpu_custom_call.1} parent=1 // pred_check
      _
    $region7: #{tpu_custom_call.1} parent=1 // pred_check_branch
      %22 = sbr.rel (0) target = $region9
    $region8: #{tpu_custom_call.1} parent=1 // pred_region
      _
    $region9: #{tpu_custom_call.1} parent=1 // pred_fallthru
      _
    // Predicated region
    $region10: #{tpu_custom_call.1} parent=1 // pred_check
      _
    $region11: #{tpu_custom_call.1} parent=1 // pred_check_branch
      %24 = sbr.rel (0) target = $region13
    $region12: #{tpu_custom_call.1} parent=1 // pred_region
      %25 = dma.done [#allocation3], 7168
    $region13: #{tpu_custom_call.1} parent=1 // pred_fallthru
      _
    %v26 = vld [vmem:[#allocation2] sm:$0xff]
    %v27 = vld [vmem:[#allocation2 + $0x38] sm:$0xff]
    %v28 = vld [vmem:[#allocation2 + $0x70] sm:$0xff]
    %v29 = vld [vmem:[#allocation2 + $0xa8] sm:$0xff]
    %v30 = vld [vmem:[#allocation2 + $0xe0] sm:$0xff]
    %v31 = vld [vmem:[#allocation2 + $0x118] sm:$0xff]
    %v32 = vld [vmem:[#allocation2 + $0x150] sm:$0xff]
    %v33 = vld [vmem:[#allocation2 + $0x188] sm:$0xff]
    %34 = vadd.xlane.f32.xlu0 %v26
    %v35 = vpop.xlane.xlu0 %34
    %36 = vadd.xlane.f32.xlu0 %v27
    %v37 = vpop.xlane.xlu0 %36
    %38 = vadd.xlane.f32.xlu0 %v28
    %v39 = vpop.xlane.xlu0 %38
    %40 = vadd.xlane.f32.xlu0 %v29
    %v41 = vpop.xlane.xlu0 %40
    %42 = vadd.xlane.f32.xlu0 %v30
    %v43 = vpop.xlane.xlu0 %42
    %44 = vadd.xlane.f32.xlu0 %v31
    %v45 = vpop.xlane.xlu0 %44
    %46 = vadd.xlane.f32.xlu0 %v32
    %v47 = vpop.xlane.xlu0 %46
    %48 = vadd.xlane.f32.xlu0 %v33
    %v49 = vpop.xlane.xlu0 %48
    %v50 = vadd.f32 %v35, 0.0
    %v51 = vadd.f32 %v37, 0.0
    %v52 = vadd.f32 %v39, 0.0
    %v53 = vadd.f32 %v41, 0.0
    %v54 = vadd.f32 %v43, 0.0
    %v55 = vadd.f32 %v45, 0.0
    %v56 = vadd.f32 %v47, 0.0
    %v57 = vadd.f32 %v49, 0.0
    %v58 = vmul.f32 %v26, %v26
    %v59 = vmul.f32 %v27, %v27
    %v60 = vmul.f32 %v28, %v28
    %v61 = vmul.f32 %v29, %v29
    %v62 = vmul.f32 %v30, %v30
    %v63 = vmul.f32 %v31, %v31
    %v64 = vmul.f32 %v32, %v32
    %v65 = vmul.f32 %v33, %v33
    %66 = vadd.xlane.f32.xlu0 %v58
    %v67 = vpop.xlane.xlu0 %66
    %68 = vadd.xlane.f32.xlu0 %v59
    %v69 = vpop.xlane.xlu0 %68
    %70 = vadd.xlane.f32.xlu0 %v60
    %v71 = vpop.xlane.xlu0 %70
    %72 = vadd.xlane.f32.xlu0 %v61
    %v73 = vpop.xlane.xlu0 %72
    %74 = vadd.xlane.f32.xlu0 %v62
    %v75 = vpop.xlane.xlu0 %74
    %76 = vadd.xlane.f32.xlu0 %v63
    %v77 = vpop.xlane.xlu0 %76
    %78 = vadd.xlane.f32.xlu0 %v64
    %v79 = vpop.xlane.xlu0 %78
    %80 = vadd.xlane.f32.xlu0 %v65
    %v81 = vpop.xlane.xlu0 %80
    %v82 = vadd.f32 %v67, 0.0
    %v83 = vadd.f32 %v69, 0.0
    %v84 = vadd.f32 %v71, 0.0
    %v85 = vadd.f32 %v73, 0.0
    %v86 = vadd.f32 %v75, 0.0
    %v87 = vadd.f32 %v77, 0.0
    %v88 = vadd.f32 %v79, 0.0
    %v89 = vadd.f32 %v81, 0.0
    %s90 = scalar_lea.vmem [#allocation2], 8
    %v91 = vld [vmem:[%s90] sm:$0xff]
    %v92 = vld [vmem:[%s90 + $0x38] sm:$0xff]
    %v93 = vld [vmem:[%s90 + $0x70] sm:$0xff]
    %v94 = vld [vmem:[%s90 + $0xa8] sm:$0xff]
    %v95 = vld [vmem:[%s90 + $0xe0] sm:$0xff]
    %v96 = vld [vmem:[%s90 + $0x118] sm:$0xff]
    %v97 = vld [vmem:[%s90 + $0x150] sm:$0xff]
    %v98 = vld [vmem:[%s90 + $0x188] sm:$0xff]
    %99 = vadd.xlane.f32.xlu0 %v91
    %v100 = vpop.xlane.xlu0 %99
    %101 = vadd.xlane.f32.xlu0 %v92
    %v102 = vpop.xlane.xlu0 %101
    %103 = vadd.xlane.f32.xlu0 %v93
    %v104 = vpop.xlane.xlu0 %103
    %105 = vadd.xlane.f32.xlu0 %v94
    %v106 = vpop.xlane.xlu0 %105
    %107 = vadd.xlane.f32.xlu0 %v95
    %v108 = vpop.xlane.xlu0 %107
    %109 = vadd.xlane.f32.xlu0 %v96
    %v110 = vpop.xlane.xlu0 %109
    %111 = vadd.xlane.f32.xlu0 %v97
    %v112 = vpop.xlane.xlu0 %111
    %113 = vadd.xlane.f32.xlu0 %v98
    %v114 = vpop.xlane.xlu0 %113
    %v115 = vadd.f32 %v50, %v100
    %v116 = vadd.f32 %v51, %v102
    %v117 = vadd.f32 %v52, %v104
    %v118 = vadd.f32 %v53, %v106
    %v119 = vadd.f32 %v54, %v108
    %v120 = vadd.f32 %v55, %v110
    %v121 = vadd.f32 %v56, %v112
    %v122 = vadd.f32 %v57, %v114
    %v123 = vmul.f32 %v91, %v91
    %v124 = vmul.f32 %v92, %v92
    %v125 = vmul.f32 %v93, %v93
    %v126 = vmul.f32 %v94, %v94
    %v127 = vmul.f32 %v95, %v95
    %v128 = vmul.f32 %v96, %v96
    %v129 = vmul.f32 %v97, %v97
    %v130 = vmul.f32 %v98, %v98
    %131 = vadd.xlane.f32.xlu0 %v123
    %v132 = vpop.xlane.xlu0 %131
    %133 = vadd.xlane.f32.xlu0 %v124
    %v134 = vpop.xlane.xlu0 %133
    %135 = vadd.xlane.f32.xlu0 %v125
    %v136 = vpop.xlane.xlu0 %135
    %137 = vadd.xlane.f32.xlu0 %v126
    %v138 = vpop.xlane.xlu0 %137
    %139 = vadd.xlane.f32.xlu0 %v127
    %v140 = vpop.xlane.xlu0 %139
    %141 = vadd.xlane.f32.xlu0 %v128
    %v142 = vpop.xlane.xlu0 %141
    %143 = vadd.xlane.f32.xlu0 %v129
    %v144 = vpop.xlane.xlu0 %143
    %145 = vadd.xlane.f32.xlu0 %v130
    %v146 = vpop.xlane.xlu0 %145
    %v147 = vadd.f32 %v82, %v132
    %v148 = vadd.f32 %v83, %v134
    %v149 = vadd.f32 %v84, %v136
    %v150 = vadd.f32 %v85, %v138
    %v151 = vadd.f32 %v86, %v140
    %v152 = vadd.f32 %v87, %v142
    %v153 = vadd.f32 %v88, %v144
    %v154 = vadd.f32 %v89, %v146
    %s155 = scalar_lea.vmem [#allocation2], 16
    %v156 = vld [vmem:[%s155] sm:$0xff]
    %v157 = vld [vmem:[%s155 + $0x38] sm:$0xff]
    %v158 = vld [vmem:[%s155 + $0x70] sm:$0xff]
    %v159 = vld [vmem:[%s155 + $0xa8] sm:$0xff]
    %v160 = vld [vmem:[%s155 + $0xe0] sm:$0xff]
    %v161 = vld [vmem:[%s155 + $0x118] sm:$0xff]
    %v162 = vld [vmem:[%s155 + $0x150] sm:$0xff]
    %v163 = vld [vmem:[%s155 + $0x188] sm:$0xff]
    %164 = vadd.xlane.f32.xlu0 %v156
    %v165 = vpop.xlane.xlu0 %164
    %166 = vadd.xlane.f32.xlu0 %v157
    %v167 = vpop.xlane.xlu0 %166
    %168 = vadd.xlane.f32.xlu0 %v158
    %v169 = vpop.xlane.xlu0 %168
    %170 = vadd.xlane.f32.xlu0 %v159
    %v171 = vpop.xlane.xlu0 %170
    %172 = vadd.xlane.f32.xlu0 %v160
    %v173 = vpop.xlane.xlu0 %172
    %174 = vadd.xlane.f32.xlu0 %v161
    %v175 = vpop.xlane.xlu0 %174
    %176 = vadd.xlane.f32.xlu0 %v162
    %v177 = vpop.xlane.xlu0 %176
    %178 = vadd.xlane.f32.xlu0 %v163
    %v179 = vpop.xlane.xlu0 %178
    %v180 = vadd.f32 %v115, %v165
    %v181 = vadd.f32 %v116, %v167
    %v182 = vadd.f32 %v117, %v169
    %v183 = vadd.f32 %v118, %v171
    %v184 = vadd.f32 %v119, %v173
    %v185 = vadd.f32 %v120, %v175
    %v186 = vadd.f32 %v121, %v177
    %v187 = vadd.f32 %v122, %v179
    %v188 = vmul.f32 %v156, %v156
    %v189 = vmul.f32 %v157, %v157
    %v190 = vmul.f32 %v158, %v158
    %v191 = vmul.f32 %v159, %v159
    %v192 = vmul.f32 %v160, %v160
    %v193 = vmul.f32 %v161, %v161
    %v194 = vmul.f32 %v162, %v162
    %v195 = vmul.f32 %v163, %v163
    %196 = vadd.xlane.f32.xlu0 %v188
    %v197 = vpop.xlane.xlu0 %196
    %198 = vadd.xlane.f32.xlu0 %v189
    %v199 = vpop.xlane.xlu0 %198
    %200 = vadd.xlane.f32.xlu0 %v190
    %v201 = vpop.xlane.xlu0 %200
    %202 = vadd.xlane.f32.xlu0 %v191
    %v203 = vpop.xlane.xlu0 %202
    %204 = vadd.xlane.f32.xlu0 %v192
    %v205 = vpop.xlane.xlu0 %204
    %206 = vadd.xlane.f32.xlu0 %v193
    %v207 = vpop.xlane.xlu0 %206
    %208 = vadd.xlane.f32.xlu0 %v194
    %v209 = vpop.xlane.xlu0 %208
    %210 = vadd.xlane.f32.xlu0 %v195
    %v211 = vpop.xlane.xlu0 %210
    %v212 = vadd.f32 %v147, %v197
    %v213 = vadd.f32 %v148, %v199
    %v214 = vadd.f32 %v149, %v201
    %v215 = vadd.f32 %v150, %v203
    %v216 = vadd.f32 %v151, %v205
    %v217 = vadd.f32 %v152, %v207
    %v218 = vadd.f32 %v153, %v209
    %v219 = vadd.f32 %v154, %v211
    %s220 = scalar_lea.vmem [#allocation2], 24
    %v221 = vld [vmem:[%s220] sm:$0xff]
    %v222 = vld [vmem:[%s220 + $0x38] sm:$0xff]
    %v223 = vld [vmem:[%s220 + $0x70] sm:$0xff]
    %v224 = vld [vmem:[%s220 + $0xa8] sm:$0xff]
    %v225 = vld [vmem:[%s220 + $0xe0] sm:$0xff]
    %v226 = vld [vmem:[%s220 + $0x118] sm:$0xff]
    %v227 = vld [vmem:[%s220 + $0x150] sm:$0xff]
    %v228 = vld [vmem:[%s220 + $0x188] sm:$0xff]
    %229 = vadd.xlane.f32.xlu0 %v221
    %v230 = vpop.xlane.xlu0 %229
    %231 = vadd.xlane.f32.xlu0 %v222
    %v232 = vpop.xlane.xlu0 %231
    %233 = vadd.xlane.f32.xlu0 %v223
    %v234 = vpop.xlane.xlu0 %233
    %235 = vadd.xlane.f32.xlu0 %v224
    %v236 = vpop.xlane.xlu0 %235
    %237 = vadd.xlane.f32.xlu0 %v225
    %v238 = vpop.xlane.xlu0 %237
    %239 = vadd.xlane.f32.xlu0 %v226
    %v240 = vpop.xlane.xlu0 %239
    %241 = vadd.xlane.f32.xlu0 %v227
    %v242 = vpop.xlane.xlu0 %241
    %243 = vadd.xlane.f32.xlu0 %v228
    %v244 = vpop.xlane.xlu0 %243
    %v245 = vadd.f32 %v180, %v230
    %v246 = vadd.f32 %v181, %v232
    %v247 = vadd.f32 %v182, %v234
    %v248 = vadd.f32 %v183, %v236
    %v249 = vadd.f32 %v184, %v238
    %v250 = vadd.f32 %v185, %v240
    %v251 = vadd.f32 %v186, %v242
    %v252 = vadd.f32 %v187, %v244
    %v253 = vmul.f32 %v221, %v221
    %v254 = vmul.f32 %v222, %v222
    %v255 = vmul.f32 %v223, %v223
    %v256 = vmul.f32 %v224, %v224
    %v257 = vmul.f32 %v225, %v225
    %v258 = vmul.f32 %v226, %v226
    %v259 = vmul.f32 %v227, %v227
    %v260 = vmul.f32 %v228, %v228
    %261 = vadd.xlane.f32.xlu0 %v253
    %v262 = vpop.xlane.xlu0 %261
    %263 = vadd.xlane.f32.xlu0 %v254
    %v264 = vpop.xlane.xlu0 %263
    %265 = vadd.xlane.f32.xlu0 %v255
    %v266 = vpop.xlane.xlu0 %265
    %267 = vadd.xlane.f32.xlu0 %v256
    %v268 = vpop.xlane.xlu0 %267
    %269 = vadd.xlane.f32.xlu0 %v257
    %v270 = vpop.xlane.xlu0 %269
    %271 = vadd.xlane.f32.xlu0 %v258
    %v272 = vpop.xlane.xlu0 %271
    %273 = vadd.xlane.f32.xlu0 %v259
    %v274 = vpop.xlane.xlu0 %273
    %275 = vadd.xlane.f32.xlu0 %v260
    %v276 = vpop.xlane.xlu0 %275
    %v277 = vadd.f32 %v212, %v262
    %v278 = vadd.f32 %v213, %v264
    %v279 = vadd.f32 %v214, %v266
    %v280 = vadd.f32 %v215, %v268
    %v281 = vadd.f32 %v216, %v270
    %v282 = vadd.f32 %v217, %v272
    %v283 = vadd.f32 %v218, %v274
    %v284 = vadd.f32 %v219, %v276
    %s285 = scalar_lea.vmem [#allocation2], 32
    %v286 = vld [vmem:[%s285] sm:$0xff]
    %v287 = vld [vmem:[%s285 + $0x38] sm:$0xff]
    %v288 = vld [vmem:[%s285 + $0x70] sm:$0xff]
    %v289 = vld [vmem:[%s285 + $0xa8] sm:$0xff]
    %v290 = vld [vmem:[%s285 + $0xe0] sm:$0xff]
    %v291 = vld [vmem:[%s285 + $0x118] sm:$0xff]
    %v292 = vld [vmem:[%s285 + $0x150] sm:$0xff]
    %v293 = vld [vmem:[%s285 + $0x188] sm:$0xff]
    %294 = vadd.xlane.f32.xlu0 %v286
    %v295 = vpop.xlane.xlu0 %294
    %296 = vadd.xlane.f32.xlu0 %v287
    %v297 = vpop.xlane.xlu0 %296
    %298 = vadd.xlane.f32.xlu0 %v288
    %v299 = vpop.xlane.xlu0 %298
    %300 = vadd.xlane.f32.xlu0 %v289
    %v301 = vpop.xlane.xlu0 %300
    %302 = vadd.xlane.f32.xlu0 %v290
    %v303 = vpop.xlane.xlu0 %302
    %304 = vadd.xlane.f32.xlu0 %v291
    %v305 = vpop.xlane.xlu0 %304
    %306 = vadd.xlane.f32.xlu0 %v292
    %v307 = vpop.xlane.xlu0 %306
    %308 = vadd.xlane.f32.xlu0 %v293
    %v309 = vpop.xlane.xlu0 %308
    %v310 = vadd.f32 %v245, %v295
    %v311 = vadd.f32 %v246, %v297
    %v312 = vadd.f32 %v247, %v299
    %v313 = vadd.f32 %v248, %v301
    %v314 = vadd.f32 %v249, %v303
    %v315 = vadd.f32 %v250, %v305
    %v316 = vadd.f32 %v251, %v307
    %v317 = vadd.f32 %v252, %v309
    %v318 = vmul.f32 %v286, %v286
    %v319 = vmul.f32 %v287, %v287
    %v320 = vmul.f32 %v288, %v288
    %v321 = vmul.f32 %v289, %v289
    %v322 = vmul.f32 %v290, %v290
    %v323 = vmul.f32 %v291, %v291
    %v324 = vmul.f32 %v292, %v292
    %v325 = vmul.f32 %v293, %v293
    %326 = vadd.xlane.f32.xlu0 %v318
    %v327 = vpop.xlane.xlu0 %326
    %328 = vadd.xlane.f32.xlu0 %v319
    %v329 = vpop.xlane.xlu0 %328
    %330 = vadd.xlane.f32.xlu0 %v320
    %v331 = vpop.xlane.xlu0 %330
    %332 = vadd.xlane.f32.xlu0 %v321
    %v333 = vpop.xlane.xlu0 %332
    %334 = vadd.xlane.f32.xlu0 %v322
    %v335 = vpop.xlane.xlu0 %334
    %336 = vadd.xlane.f32.xlu0 %v323
    %v337 = vpop.xlane.xlu0 %336
    %338 = vadd.xlane.f32.xlu0 %v324
    %v339 = vpop.xlane.xlu0 %338
    %340 = vadd.xlane.f32.xlu0 %v325
    %v341 = vpop.xlane.xlu0 %340
    %v342 = vadd.f32 %v277, %v327
    %v343 = vadd.f32 %v278, %v329
    %v344 = vadd.f32 %v279, %v331
    %v345 = vadd.f32 %v280, %v333
    %v346 = vadd.f32 %v281, %v335
    %v347 = vadd.f32 %v282, %v337
    %v348 = vadd.f32 %v283, %v339
    %v349 = vadd.f32 %v284, %v341
    %s350 = scalar_lea.vmem [#allocation2], 40
    %v351 = vld [vmem:[%s350] sm:$0xff]
    %v352 = vld [vmem:[%s350 + $0x38] sm:$0xff]
    %v353 = vld [vmem:[%s350 + $0x70] sm:$0xff]
    %v354 = vld [vmem:[%s350 + $0xa8] sm:$0xff]
    %v355 = vld [vmem:[%s350 + $0xe0] sm:$0xff]
    %v356 = vld [vmem:[%s350 + $0x118] sm:$0xff]
    %v357 = vld [vmem:[%s350 + $0x150] sm:$0xff]
    %v358 = vld [vmem:[%s350 + $0x188] sm:$0xff]
    %359 = vadd.xlane.f32.xlu0 %v351
    %v360 = vpop.xlane.xlu0 %359
    %361 = vadd.xlane.f32.xlu0 %v352
    %v362 = vpop.xlane.xlu0 %361
    %363 = vadd.xlane.f32.xlu0 %v353
    %v364 = vpop.xlane.xlu0 %363
    %365 = vadd.xlane.f32.xlu0 %v354
    %v366 = vpop.xlane.xlu0 %365
    %367 = vadd.xlane.f32.xlu0 %v355
    %v368 = vpop.xlane.xlu0 %367
    %369 = vadd.xlane.f32.xlu0 %v356
    %v370 = vpop.xlane.xlu0 %369
    %371 = vadd.xlane.f32.xlu0 %v357
    %v372 = vpop.xlane.xlu0 %371
    %373 = vadd.xlane.f32.xlu0 %v358
    %v374 = vpop.xlane.xlu0 %373
    %v375 = vadd.f32 %v310, %v360
    %v376 = vadd.f32 %v311, %v362
    %v377 = vadd.f32 %v312, %v364
    %v378 = vadd.f32 %v313, %v366
    %v379 = vadd.f32 %v314, %v368
    %v380 = vadd.f32 %v315, %v370
    %v381 = vadd.f32 %v316, %v372
    %v382 = vadd.f32 %v317, %v374
    %v383 = vmul.f32 %v351, %v351
    %v384 = vmul.f32 %v352, %v352
    %v385 = vmul.f32 %v353, %v353
    %v386 = vmul.f32 %v354, %v354
    %v387 = vmul.f32 %v355, %v355
    %v388 = vmul.f32 %v356, %v356
    %v389 = vmul.f32 %v357, %v357
    %v390 = vmul.f32 %v358, %v358
    %391 = vadd.xlane.f32.xlu0 %v383
    %v392 = vpop.xlane.xlu0 %391
    %393 = vadd.xlane.f32.xlu0 %v384
    %v394 = vpop.xlane.xlu0 %393
    %395 = vadd.xlane.f32.xlu0 %v385
    %v396 = vpop.xlane.xlu0 %395
    %397 = vadd.xlane.f32.xlu0 %v386
    %v398 = vpop.xlane.xlu0 %397
    %399 = vadd.xlane.f32.xlu0 %v387
    %v400 = vpop.xlane.xlu0 %399
    %401 = vadd.xlane.f32.xlu0 %v388
    %v402 = vpop.xlane.xlu0 %401
    %403 = vadd.xlane.f32.xlu0 %v389
    %v404 = vpop.xlane.xlu0 %403
    %405 = vadd.xlane.f32.xlu0 %v390
    %v406 = vpop.xlane.xlu0 %405
    %v407 = vadd.f32 %v342, %v392
    %v408 = vadd.f32 %v343, %v394
    %v409 = vadd.f32 %v344, %v396
    %v410 = vadd.f32 %v345, %v398
    %v411 = vadd.f32 %v346, %v400
    %v412 = vadd.f32 %v347, %v402
    %v413 = vadd.f32 %v348, %v404
    %v414 = vadd.f32 %v349, %v406
    %s415 = scalar_lea.vmem [#allocation2], 48
    %v416 = vld [vmem:[%s415] sm:$0xff]
    %v417 = vld [vmem:[%s415 + $0x38] sm:$0xff]
    %v418 = vld [vmem:[%s415 + $0x70] sm:$0xff]
    %v419 = vld [vmem:[%s415 + $0xa8] sm:$0xff]
    %v420 = vld [vmem:[%s415 + $0xe0] sm:$0xff]
    %v421 = vld [vmem:[%s415 + $0x118] sm:$0xff]
    %v422 = vld [vmem:[%s415 + $0x150] sm:$0xff]
    %v423 = vld [vmem:[%s415 + $0x188] sm:$0xff]
    %vm424 = vcmask 130048
    %v425 = vsel %vm424, %v416, 0.0
    %426 = vadd.xlane.f32.xlu0 %v425
    %v427 = vpop.xlane.xlu0 %426
    %v428 = vsel %vm424, %v417, 0.0
    %429 = vadd.xlane.f32.xlu0 %v428
    %v430 = vpop.xlane.xlu0 %429
    %v431 = vsel %vm424, %v418, 0.0
    %432 = vadd.xlane.f32.xlu0 %v431
    %v433 = vpop.xlane.xlu0 %432
    %v434 = vsel %vm424, %v419, 0.0
    %435 = vadd.xlane.f32.xlu0 %v434
    %v436 = vpop.xlane.xlu0 %435
    %v437 = vsel %vm424, %v420, 0.0
    %438 = vadd.xlane.f32.xlu0 %v437
    %v439 = vpop.xlane.xlu0 %438
    %v440 = vsel %vm424, %v421, 0.0
    %441 = vadd.xlane.f32.xlu0 %v440
    %v442 = vpop.xlane.xlu0 %441
    %v443 = vsel %vm424, %v422, 0.0
    %444 = vadd.xlane.f32.xlu0 %v443
    %v445 = vpop.xlane.xlu0 %444
    %v446 = vsel %vm424, %v423, 0.0
    %447 = vadd.xlane.f32.xlu0 %v446
    %v448 = vpop.xlane.xlu0 %447
    %v449 = vadd.f32 %v375, %v427
    %v450 = vadd.f32 %v376, %v430
    %v451 = vadd.f32 %v377, %v433
    %v452 = vadd.f32 %v378, %v436
    %v453 = vadd.f32 %v379, %v439
    %v454 = vadd.f32 %v380, %v442
    %v455 = vadd.f32 %v381, %v445
    %v456 = vadd.f32 %v382, %v448
    %v457 = vmul.f32 %v416, %v416
    %v458 = vmul.f32 %v417, %v417
    %v459 = vmul.f32 %v418, %v418
    %v460 = vmul.f32 %v419, %v419
    %v461 = vmul.f32 %v420, %v420
    %v462 = vmul.f32 %v421, %v421
    %v463 = vmul.f32 %v422, %v422
    %v464 = vmul.f32 %v423, %v423
    %v465 = vsel %vm424, %v457, 0.0
    %466 = vadd.xlane.f32.xlu0 %v465
    %v467 = vpop.xlane.xlu0 %466
    %v468 = vsel %vm424, %v458, 0.0
    %469 = vadd.xlane.f32.xlu0 %v468
    %v470 = vpop.xlane.xlu0 %469
    %v471 = vsel %vm424, %v459, 0.0
    %472 = vadd.xlane.f32.xlu0 %v471
    %v473 = vpop.xlane.xlu0 %472
    %v474 = vsel %vm424, %v460, 0.0
    %475 = vadd.xlane.f32.xlu0 %v474
    %v476 = vpop.xlane.xlu0 %475
    %v477 = vsel %vm424, %v461, 0.0
    %478 = vadd.xlane.f32.xlu0 %v477
    %v479 = vpop.xlane.xlu0 %478
    %v480 = vsel %vm424, %v462, 0.0
    %481 = vadd.xlane.f32.xlu0 %v480
    %v482 = vpop.xlane.xlu0 %481
    %v483 = vsel %vm424, %v463, 0.0
    %484 = vadd.xlane.f32.xlu0 %v483
    %v485 = vpop.xlane.xlu0 %484
    %v486 = vsel %vm424, %v464, 0.0
    %487 = vadd.xlane.f32.xlu0 %v486
    %v488 = vpop.xlane.xlu0 %487
    %v489 = vadd.f32 %v407, %v467
    %v490 = vadd.f32 %v408, %v470
    %v491 = vadd.f32 %v409, %v473
    %v492 = vadd.f32 %v410, %v476
    %v493 = vadd.f32 %v411, %v479
    %v494 = vadd.f32 %v412, %v482
    %v495 = vadd.f32 %v413, %v485
    %v496 = vadd.f32 %v414, %v488
    %v497 = vmul.f32 %v449, 0.0012755102
    %v498 = vmul.f32 %v450, 0.0012755102
    %v499 = vmul.f32 %v451, 0.0012755102
    %v500 = vmul.f32 %v452, 0.0012755102
    %v501 = vmul.f32 %v453, 0.0012755102
    %v502 = vmul.f32 %v454, 0.0012755102
    %v503 = vmul.f32 %v455, 0.0012755102
    %v504 = vmul.f32 %v456, 0.0012755102
    %v505 = vmul.f32 %v489, 0.0012755102
    %v506 = vmul.f32 %v490, 0.0012755102
    %v507 = vmul.f32 %v491, 0.0012755102
    %v508 = vmul.f32 %v492, 0.0012755102
    %v509 = vmul.f32 %v493, 0.0012755102
    %v510 = vmul.f32 %v494, 0.0012755102
    %v511 = vmul.f32 %v495, 0.0012755102
    %v512 = vmul.f32 %v496, 0.0012755102
    %v513 = vmul.f32 %v497, %v497
    %v514 = vmul.f32 %v498, %v498
    %v515 = vmul.f32 %v499, %v499
    %v516 = vmul.f32 %v500, %v500
    %v517 = vmul.f32 %v501, %v501
    %v518 = vmul.f32 %v502, %v502
    %v519 = vmul.f32 %v503, %v503
    %v520 = vmul.f32 %v504, %v504
    %v521 = vsub.f32 %v505, %v513
    %v522 = vsub.f32 %v506, %v514
    %v523 = vsub.f32 %v507, %v515
    %v524 = vsub.f32 %v508, %v516
    %v525 = vsub.f32 %v509, %v517
    %v526 = vsub.f32 %v510, %v518
    %v527 = vsub.f32 %v511, %v519
    %v528 = vsub.f32 %v512, %v520
    %v529 = vadd.f32 %v521, 0.001
    %v530 = vadd.f32 %v522, 0.001
    %v531 = vadd.f32 %v523, 0.001
    %v532 = vadd.f32 %v524, 0.001
    %v533 = vadd.f32 %v525, 0.001
    %v534 = vadd.f32 %v526, 0.001
    %v535 = vadd.f32 %v527, 0.001
    %v536 = vadd.f32 %v528, 0.001
    %v537 = vrsqrt.pop %v529
    %v538 = vrsqrt.pop %v530
    %v539 = vrsqrt.pop %v531
    %v540 = vrsqrt.pop %v532
    %v541 = vrsqrt.pop %v533
    %v542 = vrsqrt.pop %v534
    %v543 = vrsqrt.pop %v535
    %v544 = vrsqrt.pop %v536
    %v545 = vld [vmem:[%s1] sm:$0xff]
    %v546 = vld [vmem:[%s1 + $0x8] sm:$0xff]
    %v547 = vld [vmem:[%s1 + $0x10] sm:$0xff]
    %v548 = vld [vmem:[%s1 + $0x18] sm:$0xff]
    %v549 = vld [vmem:[%s1 + $0x20] sm:$0xff]
    %v550 = vld [vmem:[%s1 + $0x28] sm:$0xff]
    %v551 = vld [vmem:[%s1 + $0x30] sm:$0xff]
    %v552 = vld [vmem:[%s1 + $0x38] sm:$0xff]
    %v553 = vmul.f32 %v537, %v545
    %v554 = vmul.f32 %v538, %v546
    %v555 = vmul.f32 %v539, %v547
    %v556 = vmul.f32 %v540, %v548
    %v557 = vmul.f32 %v541, %v549
    %v558 = vmul.f32 %v542, %v550
    %v559 = vmul.f32 %v543, %v551
    %v560 = vmul.f32 %v544, %v552
    %v561 = vmul.f32 %v497, %v553
    %v562 = vmul.f32 %v498, %v554
    %v563 = vmul.f32 %v499, %v555
    %v564 = vmul.f32 %v500, %v556
    %v565 = vmul.f32 %v501, %v557
    %v566 = vmul.f32 %v502, %v558
    %v567 = vmul.f32 %v503, %v559
    %v568 = vmul.f32 %v504, %v560
    %577 = vrot.lane.b32.xlu0 %v561, 1
    %v578 = vpop.permute.xlu0 %577
    %579 = vrot.lane.b32.xlu0 %v562, 1
    %v580 = vpop.permute.xlu0 %579
    %581 = vrot.lane.b32.xlu0 %v563, 1
    %v582 = vpop.permute.xlu0 %581
    %583 = vrot.lane.b32.xlu0 %v564, 1
    %v584 = vpop.permute.xlu0 %583
    %585 = vrot.lane.b32.xlu0 %v565, 1
    %v586 = vpop.permute.xlu0 %585
    %587 = vrot.lane.b32.xlu0 %v566, 1
    %v588 = vpop.permute.xlu0 %587
    %589 = vrot.lane.b32.xlu0 %v567, 1
    %v590 = vpop.permute.xlu0 %589
    %591 = vrot.lane.b32.xlu0 %v568, 1
    %v592 = vpop.permute.xlu0 %591
    %v601 = vsub.f32 %v545, %v578
    %v602 = vsub.f32 %v546, %v580
    %v603 = vsub.f32 %v547, %v582
    %v604 = vsub.f32 %v548, %v584
    %v605 = vsub.f32 %v549, %v586
    %v606 = vsub.f32 %v550, %v588
    %v607 = vsub.f32 %v551, %v590
    %v608 = vsub.f32 %v552, %v592
    %610 = vset.pattern.permute.xlu0 0
    %611 = vperm.xlu0 %610, %v553
    %v612 = vpop.permute.xlu0 %611
    %615 = vset.pattern.permute.xlu0 0
    %616 = vperm.xlu0 %615, %v554
    %v617 = vpop.permute.xlu0 %616
    %620 = vset.pattern.permute.xlu0 0
    %621 = vperm.xlu0 %620, %v555
    %v622 = vpop.permute.xlu0 %621
    %625 = vset.pattern.permute.xlu0 0
    %626 = vperm.xlu0 %625, %v556
    %v627 = vpop.permute.xlu0 %626
    %630 = vset.pattern.permute.xlu0 0
    %631 = vperm.xlu0 %630, %v557
    %v632 = vpop.permute.xlu0 %631
    %635 = vset.pattern.permute.xlu0 0
    %636 = vperm.xlu0 %635, %v558
    %v637 = vpop.permute.xlu0 %636
    %640 = vset.pattern.permute.xlu0 0
    %641 = vperm.xlu0 %640, %v559
    %v642 = vpop.permute.xlu0 %641
    %645 = vset.pattern.permute.xlu0 0
    %646 = vperm.xlu0 %645, %v560
    %v647 = vpop.permute.xlu0 %646
    %650 = vset.pattern.permute.xlu0 1
    %651 = vperm.xlu0 %650, %v601
    %v652 = vpop.permute.xlu0 %651
    %655 = vset.pattern.permute.xlu0 1
    %656 = vperm.xlu0 %655, %v602
    %v657 = vpop.permute.xlu0 %656
    %660 = vset.pattern.permute.xlu0 1
    %661 = vperm.xlu0 %660, %v603
    %v662 = vpop.permute.xlu0 %661
    %665 = vset.pattern.permute.xlu0 1
    %666 = vperm.xlu0 %665, %v604
    %v667 = vpop.permute.xlu0 %666
    %670 = vset.pattern.permute.xlu0 1
    %671 = vperm.xlu0 %670, %v605
    %v672 = vpop.permute.xlu0 %671
    %675 = vset.pattern.permute.xlu0 1
    %676 = vperm.xlu0 %675, %v606
    %v677 = vpop.permute.xlu0 %676
    %680 = vset.pattern.permute.xlu0 1
    %681 = vperm.xlu0 %680, %v607
    %v682 = vpop.permute.xlu0 %681
    %685 = vset.pattern.permute.xlu0 1
    %686 = vperm.xlu0 %685, %v608
    %v687 = vpop.permute.xlu0 %686
    %v689 = vmul.f32 %v26, %v612
    %v690 = vmul.f32 %v27, %v617
    %v691 = vmul.f32 %v28, %v622
    %v692 = vmul.f32 %v29, %v627
    %v693 = vmul.f32 %v30, %v632
    %v694 = vmul.f32 %v31, %v637
    %v695 = vmul.f32 %v32, %v642
    %v696 = vmul.f32 %v33, %v647
    %v697 = vadd.f32 %v689, %v652
    %v698 = vadd.f32 %v690, %v657
    %v699 = vadd.f32 %v691, %v662
    %v700 = vadd.f32 %v692, %v667
    %v701 = vadd.f32 %v693, %v672
    %v702 = vadd.f32 %v694, %v677
    %v703 = vadd.f32 %v695, %v682
    %v704 = vadd.f32 %v696, %v687
    %v705 = vmax.f32 %v697, 0.0
    %v706 = vmax.f32 %v698, 0.0
    %v707 = vmax.f32 %v699, 0.0
    %v708 = vmax.f32 %v700, 0.0
    %v709 = vmax.f32 %v701, 0.0
    %v710 = vmax.f32 %v702, 0.0
    %v711 = vmax.f32 %v703, 0.0
    %v712 = vmax.f32 %v704, 0.0
    %713 = vst [vmem:[#allocation5] sm:$0xff] %v705
    %714 = vst [vmem:[#allocation5 + $0x38] sm:$0xff] %v706
    %715 = vst [vmem:[#allocation5 + $0x70] sm:$0xff] %v707
    %716 = vst [vmem:[#allocation5 + $0xa8] sm:$0xff] %v708
    %717 = vst [vmem:[#allocation5 + $0xe0] sm:$0xff] %v709
    %718 = vst [vmem:[#allocation5 + $0x118] sm:$0xff] %v710
    %719 = vst [vmem:[#allocation5 + $0x150] sm:$0xff] %v711
    %720 = vst [vmem:[#allocation5 + $0x188] sm:$0xff] %v712
    %v721 = vld [vmem:[%s90] sm:$0xff]
    %v722 = vld [vmem:[%s90 + $0x38] sm:$0xff]
    %v723 = vld [vmem:[%s90 + $0x70] sm:$0xff]
    %v724 = vld [vmem:[%s90 + $0xa8] sm:$0xff]
    %v725 = vld [vmem:[%s90 + $0xe0] sm:$0xff]
    %v726 = vld [vmem:[%s90 + $0x118] sm:$0xff]
    %v727 = vld [vmem:[%s90 + $0x150] sm:$0xff]
    %v728 = vld [vmem:[%s90 + $0x188] sm:$0xff]
    %v729 = vmul.f32 %v721, %v612
    %v730 = vmul.f32 %v722, %v617
    %v731 = vmul.f32 %v723, %v622
    %v732 = vmul.f32 %v724, %v627
    %v733 = vmul.f32 %v725, %v632
    %v734 = vmul.f32 %v726, %v637
    %v735 = vmul.f32 %v727, %v642
    %v736 = vmul.f32 %v728, %v647
    %v737 = vadd.f32 %v729, %v652
    %v738 = vadd.f32 %v730, %v657
    %v739 = vadd.f32 %v731, %v662
    %v740 = vadd.f32 %v732, %v667
    %v741 = vadd.f32 %v733, %v672
    %v742 = vadd.f32 %v734, %v677
    %v743 = vadd.f32 %v735, %v682
    %v744 = vadd.f32 %v736, %v687
    %v745 = vmax.f32 %v737, 0.0
    %v746 = vmax.f32 %v738, 0.0
    %v747 = vmax.f32 %v739, 0.0
    %v748 = vmax.f32 %v740, 0.0
    %v749 = vmax.f32 %v741, 0.0
    %v750 = vmax.f32 %v742, 0.0
    %v751 = vmax.f32 %v743, 0.0
    %v752 = vmax.f32 %v744, 0.0
    %s753 = scalar_lea.vmem [#allocation5], 8
    %754 = vst [vmem:[%s753] sm:$0xff] %v745
    %755 = vst [vmem:[%s753 + $0x38] sm:$0xff] %v746
    %756 = vst [vmem:[%s753 + $0x70] sm:$0xff] %v747
    %757 = vst [vmem:[%s753 + $0xa8] sm:$0xff] %v748
    %758 = vst [vmem:[%s753 + $0xe0] sm:$0xff] %v749
    %759 = vst [vmem:[%s753 + $0x118] sm:$0xff] %v750
    %760 = vst [vmem:[%s753 + $0x150] sm:$0xff] %v751
    %761 = vst [vmem:[%s753 + $0x188] sm:$0xff] %v752
    %v762 = vld [vmem:[%s155] sm:$0xff]
    %v763 = vld [vmem:[%s155 + $0x38] sm:$0xff]
    %v764 = vld [vmem:[%s155 + $0x70] sm:$0xff]
    %v765 = vld [vmem:[%s155 + $0xa8] sm:$0xff]
    %v766 = vld [vmem:[%s155 + $0xe0] sm:$0xff]
    %v767 = vld [vmem:[%s155 + $0x118] sm:$0xff]
    %v768 = vld [vmem:[%s155 + $0x150] sm:$0xff]
    %v769 = vld [vmem:[%s155 + $0x188] sm:$0xff]
    %v770 = vmul.f32 %v762, %v612
    %v771 = vmul.f32 %v763, %v617
    %v772 = vmul.f32 %v764, %v622
    %v773 = vmul.f32 %v765, %v627
    %v774 = vmul.f32 %v766, %v632
    %v775 = vmul.f32 %v767, %v637
    %v776 = vmul.f32 %v768, %v642
    %v777 = vmul.f32 %v769, %v647
    %v778 = vadd.f32 %v770, %v652
    %v779 = vadd.f32 %v771, %v657
    %v780 = vadd.f32 %v772, %v662
    %v781 = vadd.f32 %v773, %v667
    %v782 = vadd.f32 %v774, %v672
    %v783 = vadd.f32 %v775, %v677
    %v784 = vadd.f32 %v776, %v682
    %v785 = vadd.f32 %v777, %v687
    %v786 = vmax.f32 %v778, 0.0
    %v787 = vmax.f32 %v779, 0.0
    %v788 = vmax.f32 %v780, 0.0
    %v789 = vmax.f32 %v781, 0.0
    %v790 = vmax.f32 %v782, 0.0
    %v791 = vmax.f32 %v783, 0.0
    %v792 = vmax.f32 %v784, 0.0
    %v793 = vmax.f32 %v785, 0.0
    %s794 = scalar_lea.vmem [#allocation5], 16
    %795 = vst [vmem:[%s794] sm:$0xff] %v786
    %796 = vst [vmem:[%s794 + $0x38] sm:$0xff] %v787
    %797 = vst [vmem:[%s794 + $0x70] sm:$0xff] %v788
    %798 = vst [vmem:[%s794 + $0xa8] sm:$0xff] %v789
    %799 = vst [vmem:[%s794 + $0xe0] sm:$0xff] %v790
    %800 = vst [vmem:[%s794 + $0x118] sm:$0xff] %v791
    %801 = vst [vmem:[%s794 + $0x150] sm:$0xff] %v792
    %802 = vst [vmem:[%s794 + $0x188] sm:$0xff] %v793
    %v803 = vld [vmem:[%s220] sm:$0xff]
    %v804 = vld [vmem:[%s220 + $0x38] sm:$0xff]
    %v805 = vld [vmem:[%s220 + $0x70] sm:$0xff]
    %v806 = vld [vmem:[%s220 + $0xa8] sm:$0xff]
    %v807 = vld [vmem:[%s220 + $0xe0] sm:$0xff]
    %v808 = vld [vmem:[%s220 + $0x118] sm:$0xff]
    %v809 = vld [vmem:[%s220 + $0x150] sm:$0xff]
    %v810 = vld [vmem:[%s220 + $0x188] sm:$0xff]
    %v811 = vmul.f32 %v803, %v612
    %v812 = vmul.f32 %v804, %v617
    %v813 = vmul.f32 %v805, %v622
    %v814 = vmul.f32 %v806, %v627
    %v815 = vmul.f32 %v807, %v632
    %v816 = vmul.f32 %v808, %v637
    %v817 = vmul.f32 %v809, %v642
    %v818 = vmul.f32 %v810, %v647
    %v819 = vadd.f32 %v811, %v652
    %v820 = vadd.f32 %v812, %v657
    %v821 = vadd.f32 %v813, %v662
    %v822 = vadd.f32 %v814, %v667
    %v823 = vadd.f32 %v815, %v672
    %v824 = vadd.f32 %v816, %v677
    %v825 = vadd.f32 %v817, %v682
    %v826 = vadd.f32 %v818, %v687
    %v827 = vmax.f32 %v819, 0.0
    %v828 = vmax.f32 %v820, 0.0
    %v829 = vmax.f32 %v821, 0.0
    %v830 = vmax.f32 %v822, 0.0
    %v831 = vmax.f32 %v823, 0.0
    %v832 = vmax.f32 %v824, 0.0
    %v833 = vmax.f32 %v825, 0.0
    %v834 = vmax.f32 %v826, 0.0
    %s835 = scalar_lea.vmem [#allocation5], 24
    %836 = vst [vmem:[%s835] sm:$0xff] %v827
    %837 = vst [vmem:[%s835 + $0x38] sm:$0xff] %v828
    %838 = vst [vmem:[%s835 + $0x70] sm:$0xff] %v829
    %839 = vst [vmem:[%s835 + $0xa8] sm:$0xff] %v830
    %840 = vst [vmem:[%s835 + $0xe0] sm:$0xff] %v831
    %841 = vst [vmem:[%s835 + $0x118] sm:$0xff] %v832
    %842 = vst [vmem:[%s835 + $0x150] sm:$0xff] %v833
    %843 = vst [vmem:[%s835 + $0x188] sm:$0xff] %v834
    %v844 = vld [vmem:[%s285] sm:$0xff]
    %v845 = vld [vmem:[%s285 + $0x38] sm:$0xff]
    %v846 = vld [vmem:[%s285 + $0x70] sm:$0xff]
    %v847 = vld [vmem:[%s285 + $0xa8] sm:$0xff]
    %v848 = vld [vmem:[%s285 + $0xe0] sm:$0xff]
    %v849 = vld [vmem:[%s285 + $0x118] sm:$0xff]
    %v850 = vld [vmem:[%s285 + $0x150] sm:$0xff]
    %v851 = vld [vmem:[%s285 + $0x188] sm:$0xff]
    %v852 = vmul.f32 %v844, %v612
    %v853 = vmul.f32 %v845, %v617
    %v854 = vmul.f32 %v846, %v622
    %v855 = vmul.f32 %v847, %v627
    %v856 = vmul.f32 %v848, %v632
    %v857 = vmul.f32 %v849, %v637
    %v858 = vmul.f32 %v850, %v642
    %v859 = vmul.f32 %v851, %v647
    %v860 = vadd.f32 %v852, %v652
    %v861 = vadd.f32 %v853, %v657
    %v862 = vadd.f32 %v854, %v662
    %v863 = vadd.f32 %v855, %v667
    %v864 = vadd.f32 %v856, %v672
    %v865 = vadd.f32 %v857, %v677
    %v866 = vadd.f32 %v858, %v682
    %v867 = vadd.f32 %v859, %v687
    %v868 = vmax.f32 %v860, 0.0
    %v869 = vmax.f32 %v861, 0.0
    %v870 = vmax.f32 %v862, 0.0
    %v871 = vmax.f32 %v863, 0.0
    %v872 = vmax.f32 %v864, 0.0
    %v873 = vmax.f32 %v865, 0.0
    %v874 = vmax.f32 %v866, 0.0
    %v875 = vmax.f32 %v867, 0.0
    %s876 = scalar_lea.vmem [#allocation5], 32
    %877 = vst [vmem:[%s876] sm:$0xff] %v868
    %878 = vst [vmem:[%s876 + $0x38] sm:$0xff] %v869
    %879 = vst [vmem:[%s876 + $0x70] sm:$0xff] %v870
    %880 = vst [vmem:[%s876 + $0xa8] sm:$0xff] %v871
    %881 = vst [vmem:[%s876 + $0xe0] sm:$0xff] %v872
    %882 = vst [vmem:[%s876 + $0x118] sm:$0xff] %v873
    %883 = vst [vmem:[%s876 + $0x150] sm:$0xff] %v874
    %884 = vst [vmem:[%s876 + $0x188] sm:$0xff] %v875
    %v885 = vld [vmem:[%s350] sm:$0xff]
    %v886 = vld [vmem:[%s350 + $0x38] sm:$0xff]
    %v887 = vld [vmem:[%s350 + $0x70] sm:$0xff]
    %v888 = vld [vmem:[%s350 + $0xa8] sm:$0xff]
    %v889 = vld [vmem:[%s350 + $0xe0] sm:$0xff]
    %v890 = vld [vmem:[%s350 + $0x118] sm:$0xff]
    %v891 = vld [vmem:[%s350 + $0x150] sm:$0xff]
    %v892 = vld [vmem:[%s350 + $0x188] sm:$0xff]
    %v893 = vmul.f32 %v885, %v612
    %v894 = vmul.f32 %v886, %v617
    %v895 = vmul.f32 %v887, %v622
    %v896 = vmul.f32 %v888, %v627
    %v897 = vmul.f32 %v889, %v632
    %v898 = vmul.f32 %v890, %v637
    %v899 = vmul.f32 %v891, %v642
    %v900 = vmul.f32 %v892, %v647
    %v901 = vadd.f32 %v893, %v652
    %v902 = vadd.f32 %v894, %v657
    %v903 = vadd.f32 %v895, %v662
    %v904 = vadd.f32 %v896, %v667
    %v905 = vadd.f32 %v897, %v672
    %v906 = vadd.f32 %v898, %v677
    %v907 = vadd.f32 %v899, %v682
    %v908 = vadd.f32 %v900, %v687
    %v909 = vmax.f32 %v901, 0.0
    %v910 = vmax.f32 %v902, 0.0
    %v911 = vmax.f32 %v903, 0.0
    %v912 = vmax.f32 %v904, 0.0
    %v913 = vmax.f32 %v905, 0.0
    %v914 = vmax.f32 %v906, 0.0
    %v915 = vmax.f32 %v907, 0.0
    %v916 = vmax.f32 %v908, 0.0
    %s917 = scalar_lea.vmem [#allocation5], 40
    %918 = vst [vmem:[%s917] sm:$0xff] %v909
    %919 = vst [vmem:[%s917 + $0x38] sm:$0xff] %v910
    %920 = vst [vmem:[%s917 + $0x70] sm:$0xff] %v911
    %921 = vst [vmem:[%s917 + $0xa8] sm:$0xff] %v912
    %922 = vst [vmem:[%s917 + $0xe0] sm:$0xff] %v913
    %923 = vst [vmem:[%s917 + $0x118] sm:$0xff] %v914
    %924 = vst [vmem:[%s917 + $0x150] sm:$0xff] %v915
    %925 = vst [vmem:[%s917 + $0x188] sm:$0xff] %v916
    %v926 = vld [vmem:[%s415] sm:$0xff]
    %v927 = vld [vmem:[%s415 + $0x38] sm:$0xff]
    %v928 = vld [vmem:[%s415 + $0x70] sm:$0xff]
    %v929 = vld [vmem:[%s415 + $0xa8] sm:$0xff]
    %v930 = vld [vmem:[%s415 + $0xe0] sm:$0xff]
    %v931 = vld [vmem:[%s415 + $0x118] sm:$0xff]
    %v932 = vld [vmem:[%s415 + $0x150] sm:$0xff]
    %v933 = vld [vmem:[%s415 + $0x188] sm:$0xff]
    %v934 = vmul.f32 %v926, %v612
    %v935 = vmul.f32 %v927, %v617
    %v936 = vmul.f32 %v928, %v622
    %v937 = vmul.f32 %v929, %v627
    %v938 = vmul.f32 %v930, %v632
    %v939 = vmul.f32 %v931, %v637
    %v940 = vmul.f32 %v932, %v642
    %v941 = vmul.f32 %v933, %v647
    %v942 = vadd.f32 %v934, %v652
    %v943 = vadd.f32 %v935, %v657
    %v944 = vadd.f32 %v936, %v662
    %v945 = vadd.f32 %v937, %v667
    %v946 = vadd.f32 %v938, %v672
    %v947 = vadd.f32 %v939, %v677
    %v948 = vadd.f32 %v940, %v682
    %v949 = vadd.f32 %v941, %v687
    %v950 = vmax.f32 %v942, 0.0
    %v951 = vmax.f32 %v943, 0.0
    %v952 = vmax.f32 %v944, 0.0
    %v953 = vmax.f32 %v945, 0.0
    %v954 = vmax.f32 %v946, 0.0
    %v955 = vmax.f32 %v947, 0.0
    %v956 = vmax.f32 %v948, 0.0
    %v957 = vmax.f32 %v949, 0.0
    %s958 = scalar_lea.vmem [#allocation5], 48
    %959 = vst.msk [vmem:[%s958] sm:$0xff] %vm424, %v950
    %960 = vst.msk [vmem:[%s958 + $0x38] sm:$0xff] %vm424, %v951
    %961 = vst.msk [vmem:[%s958 + $0x70] sm:$0xff] %vm424, %v952
    %962 = vst.msk [vmem:[%s958 + $0xa8] sm:$0xff] %vm424, %v953
    %963 = vst.msk [vmem:[%s958 + $0xe0] sm:$0xff] %vm424, %v954
    %964 = vst.msk [vmem:[%s958 + $0x118] sm:$0xff] %vm424, %v955
    %965 = vst.msk [vmem:[%s958 + $0x150] sm:$0xff] %vm424, %v956
    %966 = vst.msk [vmem:[%s958 + $0x188] sm:$0xff] %vm424, %v957
    // Predicated region
    $region14: #{tpu_custom_call.1} parent=1 // pred_check
      _
    $region15: #{tpu_custom_call.1} parent=1 // pred_check_branch
      %968 = sbr.rel (0) target = $region17
    $region16: #{tpu_custom_call.1} parent=1 // pred_region
      %s970 = ssub.s32 7168, 7168
      %971 = vsyncadd [#allocation4], %s970
      %s972 = sshll.u32 [#allocation5], 4
      %s973 = int_to_ptr.vmem [resolvable:$true] %s972
      %978 = dma.vmem_to_hbm [thread:$0]  %s973, 7168, %s2, [#allocation4], 896, 896, 56
    $region17: #{tpu_custom_call.1} parent=1 // pred_fallthru
      _
    // Predicated region
    $region18: #{tpu_custom_call.1} parent=1 // pred_check
      _
    $region19: #{tpu_custom_call.1} parent=1 // pred_check_branch
      %980 = sbr.rel (0) target = $region21
    $region20: #{tpu_custom_call.1} parent=1 // pred_region
      %981 = dma.done [#allocation4], 7168
    $region21: #{tpu_custom_call.1} parent=1 // pred_fallthru
      _
    %982 = vsyncpa [#allocation3], 1
    %983 = vsyncpa [#allocation4], 1

</llo_original>
